<compile_context>
chip_gen: v7x
topology: tpu7x:2x2x1
jax: 0.10.0
libtpu: 0.0.40
codegen_flags: <defaults>
</compile_context>

<pallas_src>
import functools

import numpy as np
import jax
import jax.numpy as jnp
from jax.experimental import pallas as pl
from jax.experimental.pallas import tpu as pltpu

# ----------------------------------------------------------------------------
# Static quantum-gate construction (parameter / constant setup, plain numpy).
# ----------------------------------------------------------------------------
_I2 = np.eye(2)
_X2 = np.array([[0.0, 1.0], [1.0, 0.0]])
_H2 = np.array([[1.0, 1.0], [1.0, -1.0]]) / np.sqrt(2.0)


def make_sign_matrix(q):
    # get_static_RZ: entry (n, k) = +1 if bit k (LSB-first) of n is 1, else -1.
    n = np.arange(2 ** q)
    bits = (n[:, None] >> np.arange(q)[None, :]) & 1
    return (2.0 * bits - 1.0).astype(np.float64)  # (2**q, q)


def make_rx_full(rotations, q):
    def rx(t):
        c, s = np.cos(t / 2.0), np.sin(t / 2.0)
        return np.array([[c, -1j * s], [-1j * s, c]], dtype=np.complex128)

    u = rx(rotations[0])
    for i in range(1, q):
        u = np.kron(rx(rotations[i]), u)
    return u


def get_cnot(control, target, qubits):
    # Faithful port of the module's get_CNOT (1-indexed qubits).
    swap = True
    if control > target:
        swap = False
        control, target = target, control
    diff = target - control
    if diff > 1:
        scaler = np.eye(2 ** (diff - 1))
        upper = np.kron(scaler, _I2)
        lower = np.kron(scaler, _X2)
    else:
        upper, lower = _I2, _X2
    u = (np.kron(np.array([[1.0, 0.0], [0.0, 0.0]]), upper)
         + np.kron(np.array([[0.0, 0.0], [0.0, 1.0]]), lower))
    if swap:
        s = _H2
        for _ in range(1, diff + 1):
            s = np.kron(s, _H2)
        u = s @ u @ s
    if qubits > diff + 1:
        bits_before = control - 1
        bits_after = qubits - target
        u = np.kron(np.eye(2 ** bits_after), np.kron(u, np.eye(2 ** bits_before)))
    return u


def get_cnot_ring(q):
    u = get_cnot(1, 2, q)
    for i in range(2, q):
        u = get_cnot(i, i + 1, q) @ u
    u = get_cnot(q, 1, q) @ u
    return u


# ----------------------------------------------------------------------------
# Pallas kernel: phase construction + two fused real MXU matmuls + |psi|^2.
# ----------------------------------------------------------------------------
def _qconv_kernel(x_ref, s_ref, mc_ref, ms_ref, o_ref, *, n):
    """One (batch, patch-tile) grid step; patches live on the lane axis.

    x_ref : (1, q_pad, TP) f32  patch values (zero-padded qubit rows)
    s_ref : (n, q_pad)     bf16 sign matrix (+-1, zero-padded columns)
    mc_ref: (2n, n)        bf16 [[ Re M], [ Im M]] * 2**(-q/2)
    ms_ref: (2n, n)        bf16 [[-Im M], [ Re M]] * 2**(-q/2)
    o_ref : (1, n, TP)     f32  per-patch quantum-state probabilities
    """
    x = x_ref[0]                                            # (q_pad, TP) f32

    # a_rz = S @ x on the MXU.  S is exactly +-1/0 in bf16; x is split into bf16
    # hi/lo halves so the two tiny-K matmuls reproduce the f32 result (~2^-17
    # error) and keep the phase math accurate on every TPU generation.
    x_hi = x.astype(jnp.bfloat16)
    x_lo = (x - x_hi.astype(jnp.float32)).astype(jnp.bfloat16)
    s = s_ref[...]
    a_rz = (jnp.dot(s, x_hi, preferred_element_type=jnp.float32)
            + jnp.dot(s, x_lo, preferred_element_type=jnp.float32))   # (n, TP)

    # ||x||^2 per patch: sublane reduce (XLU slot), exact f32 (padded rows are 0).
    sumsq = jnp.sum(x * x, axis=0, keepdims=True)                      # (1, TP)

    a_rzz = 0.5 * (a_rz * a_rz - sumsq)      # sum_{i<j} x_i x_j s_i s_j   (n, TP)
    theta = 0.5 * (a_rz - a_rzz)             # RZ phase minus RZZ phase    (n, TP)

    # [Re psi; Im psi] = [Re; Im] @ cos(theta) + [-Im; Re] @ sin(theta).
    # cos/sin are cast to bf16 per-operand; no f32 (2n, TP) concat is ever built.
    cos_b = jnp.cos(theta).astype(jnp.bfloat16)
    sin_b = jnp.sin(theta).astype(jnp.bfloat16)
    res = (jnp.dot(mc_ref[...], cos_b, preferred_element_type=jnp.float32)
           + jnp.dot(ms_ref[...], sin_b, preferred_element_type=jnp.float32))
    out_r = res[:n, :]
    out_i = res[n:, :]
    o_ref[0] = out_r * out_r + out_i * out_i


# ----------------------------------------------------------------------------
# Wrapper: strided-slice patch extraction, tiling, pallas_call.
# ----------------------------------------------------------------------------
def _extract_patches_qmajor(x, k, stride):
    """(B, H, W) -> (B, q, Ho*Wo) via q contiguous strided slices.

    Row di*k + dj holds x[b, oi*stride + di, oj*stride + dj]; matches the
    reference .flatten() row-major patch ordering.  No gather, no transpose.
    """
    b, h, w = x.shape
    ho, wo = h // stride, w // stride
    rows = []
    for di in range(k):
        for dj in range(k):
            sl = x[:, di:di + (ho - 1) * stride + 1:stride,
                      dj:dj + (wo - 1) * stride + 1:stride]        # (B, Ho, Wo)
            rows.append(sl.reshape(b, ho * wo))
    return jnp.stack(rows, axis=1)                                 # (B, q, Ho*Wo)


def _choose_tile(pb_pad, batch, n):
    # Largest lane tile that stays inside the ~48 MiB scoped-VMEM budget
    # (cap 1024 for k>=3), preferring an EVEN total step count >= 2 so v7x can
    # balance its two TensorCores on the "parallel" grid axes.
    max_tp = 2048 if n <= 256 else 1024
    cands = [c for c in (2048, 1024, 512, 256, 128)
             if c <= max_tp and pb_pad % c == 0]
    for c in cands:
        steps = batch * (pb_pad // c)
        if steps >= 2 and steps % 2 == 0:
            return c
    return cands[0]


def quantum_conv2d(x, weight, kernel_size, stride):
    k = kernel_size
    q = k * k
    n = 2 ** q
    b, h, w = x.shape
    ho, wo = h // stride, w // stride
    pb = ho * wo

    # Patch tensor (B, q_pad, Pb_pad): batch-major so the kernel output is already
    # (B, channel, patch) ordered and the wrapper only trims + reshapes.
    q_pad = ((q + 7) // 8) * 8
    pb_pad = ((pb + 127) // 128) * 128
    patches = _extract_patches_qmajor(x.astype(jnp.float32), k, stride)
    patches = jnp.pad(patches, ((0, 0), (0, q_pad - q), (0, pb_pad - pb)))

    tp = _choose_tile(pb_pad, b, n)

    # Static / weight-only unitaries (parameter setup, plain numpy).
    sign = np.zeros((n, q_pad))
    sign[:, :q] = make_sign_matrix(q)                                  # (n, q_pad)
    m = get_cnot_ring(q) @ make_rx_full(np.asarray(weight).reshape(-1), q)
    m = m * (2.0 ** (-q / 2.0))                 # fold H^{⊗q}|0> amplitude into M
    mr, mi = np.real(m), np.imag(m)
    m_cos = np.concatenate([mr, mi], axis=0)                           # (2n, n)
    m_sin = np.concatenate([-mi, mr], axis=0)                          # (2n, n)

    s_dev = jnp.asarray(sign, dtype=jnp.bfloat16)     # +-1 / 0: exact in bf16
    mc_dev = jnp.asarray(m_cos, dtype=jnp.bfloat16)   # native MXU dtype, all gens
    ms_dev = jnp.asarray(m_sin, dtype=jnp.bfloat16)

    p_total = b * pb_pad
    cost = pl.CostEstimate(
        flops=int(p_total * (8 * n * n + 4 * n * q_pad)),
        transcendentals=int(p_total * 2 * n),
        bytes_accessed=int(p_total * 4 * (q_pad + n)
                           + 2 * (2 * n * n) * 2 + 2 * n * q_pad),
    )

    kern = functools.partial(_qconv_kernel, n=n)
    out = pl.pallas_call(
        kern,
        out_shape=jax.ShapeDtypeStruct((b, n, pb_pad), jnp.float32),
        grid=(b, pb_pad // tp),
        in_specs=[
            pl.BlockSpec((1, q_pad, tp), lambda bi, p: (bi, 0, p)),   # patch tile
            pl.BlockSpec((n, q_pad), lambda bi, p: (0, 0)),           # resident const
            pl.BlockSpec((2 * n, n), lambda bi, p: (0, 0)),           # resident const
            pl.BlockSpec((2 * n, n), lambda bi, p: (0, 0)),           # resident const
        ],
        out_specs=pl.BlockSpec((1, n, tp), lambda bi, p: (bi, 0, p)), # lane-dense
        compiler_params=pltpu.CompilerParams(
            dimension_semantics=("parallel", "parallel"),
            vmem_limit_bytes=48 * 1024 * 1024,
        ),
        cost_estimate=cost,
    )(patches, s_dev, mc_dev, ms_dev)

    # Batch-major output: only trim padded patches and reshape (no HBM transpose).
    return out[:, :, :pb].reshape(b, n, ho, wo)


# ----------------------------------------------------------------------------
# Pure numpy reference (mirrors sub_forward using diagonal RZ / RZZ forms).
# ----------------------------------------------------------------------------
def ref_quantum_conv2d(x, weight, k, stride):
    x = np.asarray(x, np.float64)
    w = np.asarray(weight, np.float64).reshape(-1)
    q = k * k
    n = 2 ** q
    sign = make_sign_matrix(q)
    m_unitary = get_cnot_ring(q) @ make_rx_full(w, q)
    b, h, wd = x.shape
    ho, wo = h // stride, wd // stride
    out = np.zeros((b, n, ho, wo), np.float64)
    h0 = np.ones(n) / (2.0 ** (q / 2.0))
    for bi in range(b):
        for i in range(0, h, stride):
            for j in range(0, wd, stride):
                patch = x[bi, i:i + k, j:j + k].reshape(-1)
                rz = np.exp(1j * 0.5 * (sign @ patch))
                ang = np.zeros(n)
                for a in range(q - 1):
                    for bb in range(a + 1, q):
                        ang += patch[a] * patch[bb] * sign[:, a] * sign[:, bb]
                rzz = np.exp(-1j * 0.5 * ang)
                psi = m_unitary @ (rzz * rz * h0)
                out[bi, :, i // stride, j // stride] = np.abs(psi) ** 2
    return out


if __name__ == "__main__":
    kernel_size, stride = 2, 2
    key = jax.random.PRNGKey(0)
    kx, kw = jax.random.split(key)
    x = jax.random.normal(kx, (2, 32, 32), dtype=jnp.float32)        # (B, H, W)
    weight = jax.random.normal(kw, (kernel_size, kernel_size), dtype=jnp.float32)

    out = quantum_conv2d(x, weight, kernel_size, stride)
    out = jax.block_until_ready(out)

    ref = ref_quantum_conv2d(np.asarray(x), np.asarray(weight), kernel_size, stride)
    assert out.shape == ref.shape, (out.shape, ref.shape)
    max_err = float(np.max(np.abs(np.asarray(out) - ref)))
    assert max_err < 1e-2, f"max abs error too large: {max_err}"

    print("KERNEL_OK")
</pallas_src>

<mosaic_0001>
module attributes {stable_mosaic.version = 11 : i64} {
  func.func @_qconv_kernel(%arg0: i32, %arg1: i32, %arg2: memref<1x8x256xf32, #tpu.memory_space<vmem>>, %arg3: memref<16x8xbf16, #tpu.memory_space<vmem>>, %arg4: memref<32x16xbf16, #tpu.memory_space<vmem>>, %arg5: memref<32x16xbf16, #tpu.memory_space<vmem>>, %arg6: memref<1x16x256xf32, #tpu.memory_space<vmem>>) attributes {dimension_semantics = [#tpu.dimension_semantics<parallel>, #tpu.dimension_semantics<parallel>], iteration_bounds = array<i64: 2, 1>, scalar_prefetch = 0 : i64, scratch_operands = 0 : i64, tpu.core_type = #tpu.core_type<tc>, window_params = [{transform_indices = @transform_0, window_bounds = array<i64: 1, 8, 256>}, {pipeline_mode = #tpu.pipeline_mode<synchronous>, transform_indices = @transform_1, window_bounds = array<i64: 16, 8>}, {pipeline_mode = #tpu.pipeline_mode<synchronous>, transform_indices = @transform_2, window_bounds = array<i64: 32, 16>}, {pipeline_mode = #tpu.pipeline_mode<synchronous>, transform_indices = @transform_3, window_bounds = array<i64: 32, 16>}, {transform_indices = @transform_4, window_bounds = array<i64: 1, 16, 256>}]} {
    %c0 = arith.constant 0 : index
    %c0_0 = arith.constant 0 : index
    %c0_1 = arith.constant 0 : index
    %0 = vector.load %arg2[%c0, %c0_0, %c0_1] : memref<1x8x256xf32, #tpu.memory_space<vmem>>, vector<1x8x256xf32>
    %1 = vector.shape_cast %0 : vector<1x8x256xf32> to vector<8x256xf32>
    %2 = arith.truncf %1 : vector<8x256xf32> to vector<8x256xbf16>
    %3 = arith.extf %2 : vector<8x256xbf16> to vector<8x256xf32>
    %4 = arith.subf %1, %3 : vector<8x256xf32>
    %5 = arith.truncf %4 : vector<8x256xf32> to vector<8x256xbf16>
    %c0_2 = arith.constant 0 : index
    %c0_3 = arith.constant 0 : index
    %6 = vector.load %arg3[%c0_2, %c0_3] : memref<16x8xbf16, #tpu.memory_space<vmem>>, vector<16x8xbf16>
    %cst = arith.constant dense<0.000000e+00> : vector<16x256xf32>
    %7 = tpu.matmul %6, %2, %cst {dimension_numbers = #tpu.dot_dimension_numbers<[1], [0], [0], [1], [0, 0, 1, 1], [], []>} : vector<16x8xbf16>, vector<8x256xbf16>, vector<16x256xf32> -> vector<16x256xf32>
    %cst_4 = arith.constant dense<0.000000e+00> : vector<16x256xf32>
    %8 = tpu.matmul %6, %5, %cst_4 {dimension_numbers = #tpu.dot_dimension_numbers<[1], [0], [0], [1], [0, 0, 1, 1], [], []>} : vector<16x8xbf16>, vector<8x256xbf16>, vector<16x256xf32> -> vector<16x256xf32>
    %9 = arith.addf %7, %8 : vector<16x256xf32>
    %10 = arith.mulf %1, %1 : vector<8x256xf32>
    %cst_5 = arith.constant dense<0.000000e+00> : vector<256xf32>
    %11 = vector.multi_reduction <add>, %10, %cst_5 [0] : vector<8x256xf32> to vector<256xf32>
    %12 = vector.shape_cast %11 : vector<256xf32> to vector<1x256xf32>
    %13 = arith.mulf %9, %9 : vector<16x256xf32>
    %14 = vector.broadcast %12 : vector<1x256xf32> to vector<16x256xf32>
    %15 = arith.subf %13, %14 : vector<16x256xf32>
    %cst_6 = arith.constant 5.000000e-01 : f32
    %16 = vector.broadcast %cst_6 : f32 to vector<16x256xf32>
    %17 = arith.mulf %16, %15 : vector<16x256xf32>
    %18 = arith.subf %9, %17 : vector<16x256xf32>
    %cst_7 = arith.constant 5.000000e-01 : f32
    %19 = vector.broadcast %cst_7 : f32 to vector<16x256xf32>
    %20 = arith.mulf %19, %18 : vector<16x256xf32>
    %21 = math.cos %20 : vector<16x256xf32>
    %22 = arith.truncf %21 : vector<16x256xf32> to vector<16x256xbf16>
    %23 = math.sin %20 : vector<16x256xf32>
    %24 = arith.truncf %23 : vector<16x256xf32> to vector<16x256xbf16>
    %c0_8 = arith.constant 0 : index
    %c0_9 = arith.constant 0 : index
    %25 = vector.load %arg4[%c0_8, %c0_9] : memref<32x16xbf16, #tpu.memory_space<vmem>>, vector<32x16xbf16>
    %cst_10 = arith.constant dense<0.000000e+00> : vector<32x256xf32>
    %26 = tpu.matmul %25, %22, %cst_10 {dimension_numbers = #tpu.dot_dimension_numbers<[1], [0], [0], [1], [0, 0, 1, 1], [], []>} : vector<32x16xbf16>, vector<16x256xbf16>, vector<32x256xf32> -> vector<32x256xf32>
    %c0_11 = arith.constant 0 : index
    %c0_12 = arith.constant 0 : index
    %27 = vector.load %arg5[%c0_11, %c0_12] : memref<32x16xbf16, #tpu.memory_space<vmem>>, vector<32x16xbf16>
    %cst_13 = arith.constant dense<0.000000e+00> : vector<32x256xf32>
    %28 = tpu.matmul %27, %24, %cst_13 {dimension_numbers = #tpu.dot_dimension_numbers<[1], [0], [0], [1], [0, 0, 1, 1], [], []>} : vector<32x16xbf16>, vector<16x256xbf16>, vector<32x256xf32> -> vector<32x256xf32>
    %29 = arith.addf %26, %28 : vector<32x256xf32>
    %30 = vector.extract_strided_slice %29 {offsets = [0, 0], sizes = [16, 256], strides = [1, 1]} : vector<32x256xf32> to vector<16x256xf32>
    %31 = vector.extract_strided_slice %29 {offsets = [16, 0], sizes = [16, 256], strides = [1, 1]} : vector<32x256xf32> to vector<16x256xf32>
    %32 = arith.mulf %30, %30 : vector<16x256xf32>
    %33 = arith.mulf %31, %31 : vector<16x256xf32>
    %34 = arith.addf %32, %33 : vector<16x256xf32>
    %c0_14 = arith.constant 0 : index
    %c0_15 = arith.constant 0 : index
    %c0_16 = arith.constant 0 : index
    %35 = vector.load %arg6[%c0_14, %c0_15, %c0_16] : memref<1x16x256xf32, #tpu.memory_space<vmem>>, vector<1x16x256xf32>
    %36 = vector.shape_cast %35 : vector<1x16x256xf32> to vector<16x256xf32>
    %37 = vector.shape_cast %34 : vector<16x256xf32> to vector<1x16x256xf32>
    tpu.vector_store %arg6[%c0_14, %c0_15, %c0_16], %37 {strides = array<i32>} : memref<1x16x256xf32, #tpu.memory_space<vmem>>, vector<1x16x256xf32>,
    return
  }
  func.func @transform_0(%arg0: i32, %arg1: i32) -> (i32, i32, i32) {
    %c0_i32 = arith.constant 0 : i32
    %c0_i32_0 = arith.constant 0 : i32
    return %arg0, %c0_i32, %arg1 : i32, i32, i32
  }
  func.func @transform_1(%arg0: i32, %arg1: i32) -> (i32, i32) {
    %c0_i32 = arith.constant 0 : i32
    %c0_i32_0 = arith.constant 0 : i32
    %c0_i32_1 = arith.constant 0 : i32
    return %c0_i32, %c0_i32_0 : i32, i32
  }
  func.func @transform_2(%arg0: i32, %arg1: i32) -> (i32, i32) {
    %c0_i32 = arith.constant 0 : i32
    %c0_i32_0 = arith.constant 0 : i32
    %c0_i32_1 = arith.constant 0 : i32
    return %c0_i32, %c0_i32_0 : i32, i32
  }
  func.func @transform_3(%arg0: i32, %arg1: i32) -> (i32, i32) {
    %c0_i32 = arith.constant 0 : i32
    %c0_i32_0 = arith.constant 0 : i32
    %c0_i32_1 = arith.constant 0 : i32
    return %c0_i32, %c0_i32_0 : i32, i32
  }
  func.func @transform_4(%arg0: i32, %arg1: i32) -> (i32, i32, i32) {
    %c0_i32 = arith.constant 0 : i32
    %c0_i32_0 = arith.constant 0 : i32
    return %arg0, %c0_i32, %arg1 : i32, i32, i32
  }
}

</mosaic_0001>

<llo_original>
// kernel: tpu_custom_call.1
$region0: #{tpu_custom_call.1}
  #allocation0 [shape = 'u32[]', space=smem, size = 0x4, offset = 0x4, fixed_abs, tag = 'smem constant byte address 0x4 - core index']
  #allocation1 [shape = 'u32[144,128]{1,0:T(1,128)}', space=vmem, size = 0x12000, scoped, tag = 'internal scratch']
  %s0 = inlined_call_operand.vmem [shape: f32[2,8,256], index: 0, kind: input, shape index: {}]
  %s1 = inlined_call_operand.vmem [shape: bf16[16,8], index: 1, kind: input, shape index: {}]
  %s2 = inlined_call_operand.vmem [shape: bf16[32,16], index: 2, kind: input, shape index: {}]
  %s3 = inlined_call_operand.vmem [shape: bf16[32,16], index: 3, kind: input, shape index: {}]
  %s4 = inlined_call_operand.hbm [shape: f32[2,16,256], index: 4, kind: output, shape index: {}]
  %s5 = sld [smem:[#allocation0]]
  $region49: #{tpu_custom_call.1} parent=0
    _
  %s7 = ssub.s32 1, %s5
  %s8 = scalar_select 0, %s7, %s5
  $region1: #{tpu_custom_call.1} parent=0
    #allocation2 [shape = 'u8[32768]{0}', space=vmem, size = 0x8000, scoped, tag = 'output window, operand 0']
    #allocation3 [shape = 's32[2]{0}', space=sflag, size = 0x8, scoped, tag = 'scoped memory for tpu_custom_call.1']
    %9 = vsyncpa [#allocation3], 0
    %s10 = scalar_lea.sflag [#allocation3], 1
    %11 = vsyncpa %s10, 0
    loop: start=0, step=1, limit=4
    $region2: #{tpu_custom_call.1} parent=1 // loop_pre_header
      _
    $region3: #{tpu_custom_call.1} parent=1 // loop_header
      %s13 = sphi 0, %s17
      %p14 = scmp.ge.s32.totalorder %s13, 4
      %s20 = sphi 0, %s32
      %s21 = sphi 0, %s28
      %s22 = sphi 0, %s20
      %s23 = sphi 0, %s21
      %s24 = sphi 0, %s22
      %s25 = sphi 0, %s23
      %s37 = sphi 0, %s39
      %s40 = sphi 0, %s37
      %s41 = sphi 0, %s40
      %s57 = sphi 0, %s41
      %s61 = sphi 0, %s61
      %s63 = sphi 0, %s61
      %s64 = sphi 0, %s63
      %s78 = sphi 0, %s64
      %s82 = sphi 0, %s82
      %s84 = sphi 0, %s82
      %s85 = sphi 0, %s84
      %s99 = sphi 0, %s85
      %s103 = sphi 0, %s103
      %s105 = sphi 0, %s103
      %s106 = sphi 0, %s105
      %s120 = sphi 0, %s106
      %s128 = sphi 0, %s130
      %s131 = sphi 0, %s128
      %s132 = sphi 0, %s131
      %s148 = sphi 0, %s132
    $region4: #{tpu_custom_call.1} parent=1 // loop_header_branch
      %16 = sbr.rel (%p14) target = $region8
    $region5: #{tpu_custom_call.1} parent=1 // loop_body
      %s18 = ssub.s32 %s13, 1
      %s19 = ssub.s32 %s13, 2
      %s26 = sadd.s32 1, %s21
      %p27 = scmp.ge.s32.totalorder %s26, 1
      %s28 = scalar_select %p27, 0, %s26
      %s29 = sadd.s32 1, %s20
      %s30 = scalar_select %p27, %s29, %s20
      %p31 = scmp.ge.s32.totalorder %s30, 2
      %s32 = scalar_select %p31, 0, %s30
      %s33 = ssub.s32 %s20, %s32
      %s34 = ssub.s32 %s21, %s28
      %s35 = sor.u32 %s33, %s34
      %p36 = scmp.eq.s32.totalorder %s35, 0
      %s38 = sadd.s32 %s37, 1
      %s39 = scalar_select %p36, %s37, %s38
      %p42 = pneg %p36
      %p43 = scmp.eq.s32.totalorder %s13, 1
      %p44 = por %p42, %p43
      %p45 = scmp.ne.s32.totalorder %s37, %s40
      %p46 = scmp.eq.s32.totalorder %s13, 0
      %p47 = por %p45, %p46
      %p48 = scmp.ne.s32.totalorder %s37, %s40
      %p49 = scmp.eq.s32.totalorder %s18, 1
      %p50 = por %p48, %p49
      %p51 = scmp.ne.s32.totalorder %s40, %s41
      %p52 = scmp.eq.s32.totalorder %s18, 0
      %p53 = por %p51, %p52
      %p54 = scmp.ne.s32.totalorder %s40, %s41
      %p55 = scmp.eq.s32.totalorder %s19, 1
      %p56 = por %p54, %p55
      %p58 = scmp.ne.s32.totalorder %s41, %s57
      %p59 = scmp.eq.s32.totalorder %s19, 0
      %p60 = por %p58, %p59
      %s62 = sadd.s32 %s61, 1
      %p65 = scmp.eq.s32.totalorder %s13, 1
      %p66 = scmp.ne.s32.totalorder %s61, %s63
      %p67 = scmp.eq.s32.totalorder %s13, 0
      %p68 = por %p66, %p67
      %p69 = scmp.ne.s32.totalorder %s61, %s63
      %p70 = scmp.eq.s32.totalorder %s18, 1
      %p71 = por %p69, %p70
      %p72 = scmp.ne.s32.totalorder %s63, %s64
      %p73 = scmp.eq.s32.totalorder %s18, 0
      %p74 = por %p72, %p73
      %p75 = scmp.ne.s32.totalorder %s63, %s64
      %p76 = scmp.eq.s32.totalorder %s19, 1
      %p77 = por %p75, %p76
      %p79 = scmp.ne.s32.totalorder %s64, %s78
      %p80 = scmp.eq.s32.totalorder %s19, 0
      %p81 = por %p79, %p80
      %s83 = sadd.s32 %s82, 1
      %p86 = scmp.eq.s32.totalorder %s13, 1
      %p87 = scmp.ne.s32.totalorder %s82, %s84
      %p88 = scmp.eq.s32.totalorder %s13, 0
      %p89 = por %p87, %p88
      %p90 = scmp.ne.s32.totalorder %s82, %s84
      %p91 = scmp.eq.s32.totalorder %s18, 1
      %p92 = por %p90, %p91
      %p93 = scmp.ne.s32.totalorder %s84, %s85
      %p94 = scmp.eq.s32.totalorder %s18, 0
      %p95 = por %p93, %p94
      %p96 = scmp.ne.s32.totalorder %s84, %s85
      %p97 = scmp.eq.s32.totalorder %s19, 1
      %p98 = por %p96, %p97
      %p100 = scmp.ne.s32.totalorder %s85, %s99
      %p101 = scmp.eq.s32.totalorder %s19, 0
      %p102 = por %p100, %p101
      %s104 = sadd.s32 %s103, 1
      %p107 = scmp.eq.s32.totalorder %s13, 1
      %p108 = scmp.ne.s32.totalorder %s103, %s105
      %p109 = scmp.eq.s32.totalorder %s13, 0
      %p110 = por %p108, %p109
      %p111 = scmp.ne.s32.totalorder %s103, %s105
      %p112 = scmp.eq.s32.totalorder %s18, 1
      %p113 = por %p111, %p112
      %p114 = scmp.ne.s32.totalorder %s105, %s106
      %p115 = scmp.eq.s32.totalorder %s18, 0
      %p116 = por %p114, %p115
      %p117 = scmp.ne.s32.totalorder %s105, %s106
      %p118 = scmp.eq.s32.totalorder %s19, 1
      %p119 = por %p117, %p118
      %p121 = scmp.ne.s32.totalorder %s106, %s120
      %p122 = scmp.eq.s32.totalorder %s19, 0
      %p123 = por %p121, %p122
      %s124 = ssub.s32 %s20, %s32
      %s125 = ssub.s32 %s21, %s28
      %s126 = sor.u32 %s124, %s125
      %p127 = scmp.eq.s32.totalorder %s126, 0
      %s129 = sadd.s32 %s128, 1
      %s130 = scalar_select %p127, %s128, %s129
      %p133 = pneg %p127
      %p134 = scmp.eq.s32.totalorder %s13, 1
      %p135 = por %p133, %p134
      %p136 = scmp.ne.s32.totalorder %s128, %s131
      %p137 = scmp.eq.s32.totalorder %s13, 0
      %p138 = por %p136, %p137
      %p139 = scmp.ne.s32.totalorder %s128, %s131
      %p140 = scmp.eq.s32.totalorder %s18, 1
      %p141 = por %p139, %p140
      %p142 = scmp.ne.s32.totalorder %s131, %s132
      %p143 = scmp.eq.s32.totalorder %s18, 0
      %p144 = por %p142, %p143
      %p145 = scmp.ne.s32.totalorder %s131, %s132
      %p146 = scmp.eq.s32.totalorder %s19, 1
      %p147 = por %p145, %p146
      %p149 = scmp.ne.s32.totalorder %s132, %s148
      %p150 = scmp.eq.s32.totalorder %s19, 0
      %p151 = por %p149, %p150
      %p152 = scmp.le.s32.totalorder 1, %s13
      %p153 = scmp.lt.s32.totalorder %s13, 3
      %p154 = pnand %p152, %p153
      %p155 = pneg %p154
      // Predicated region
      $region9: #{tpu_custom_call.1} parent=5 // pred_check
        _
      $region10: #{tpu_custom_call.1} parent=5 // pred_check_branch
        %157 = sbr.rel (%p154) target = $region12
      $region11: #{tpu_custom_call.1} parent=5 // pred_region
        %s158 = ssub.s32 %s13, 1
        // Predicated region
        $region13: #{tpu_custom_call.1} parent=11 // pred_check
          %p159 = pneg %p74
        $region14: #{tpu_custom_call.1} parent=11 // pred_check_branch
          %161 = sbr.rel (%p159) target = $region16
        $region15: #{tpu_custom_call.1} parent=11 // pred_region
          _
        $region16: #{tpu_custom_call.1} parent=11 // pred_fallthru
          _
        // Predicated region
        $region17: #{tpu_custom_call.1} parent=11 // pred_check
          %p162 = pneg %p95
        $region18: #{tpu_custom_call.1} parent=11 // pred_check_branch
          %164 = sbr.rel (%p162) target = $region20
        $region19: #{tpu_custom_call.1} parent=11 // pred_region
          _
        $region20: #{tpu_custom_call.1} parent=11 // pred_fallthru
          _
        // Predicated region
        $region21: #{tpu_custom_call.1} parent=11 // pred_check
          %p165 = pneg %p116
        $region22: #{tpu_custom_call.1} parent=11 // pred_check_branch
          %167 = sbr.rel (%p165) target = $region24
        $region23: #{tpu_custom_call.1} parent=11 // pred_region
          _
        $region24: #{tpu_custom_call.1} parent=11 // pred_fallthru
          _
      $region12: #{tpu_custom_call.1} parent=5 // pred_fallthru
        _
      %p168 = scmp.lt.s32.totalorder %s13, 2
      // Predicated region
      $region25: #{tpu_custom_call.1} parent=5 // pred_check
        %p169 = pneg %p168
      $region26: #{tpu_custom_call.1} parent=5 // pred_check_branch
        %171 = sbr.rel (%p169) target = $region28
      $region27: #{tpu_custom_call.1} parent=5 // pred_region
        // Predicated region
        $region29: #{tpu_custom_call.1} parent=27 // pred_check
          %p172 = pneg %p47
        $region30: #{tpu_custom_call.1} parent=27 // pred_check_branch
          %174 = sbr.rel (%p172) target = $region32
        $region31: #{tpu_custom_call.1} parent=27 // pred_region
          %s175 = smul.u32 2, %s21
          %p176 = scmp.lt.s32.totalorder %s20, 1
          %s177 = scalar_select %p176, %s20, 1
          %p178 = scmp.lt.s32.totalorder %s175, 1
          %s179 = scalar_select %p178, %s175, 1
          %s180 = smul.addr %s177, 2
          %s181 = sadd.s32 %s179, %s180
          %s182 = smul.addr %s181, 8
          %s183 = scalar_lea.vmem %s0, %s182
          %s184 = smul.u32 2, %s21
        $region32: #{tpu_custom_call.1} parent=27 // pred_fallthru
          _
      $region28: #{tpu_custom_call.1} parent=5 // pred_fallthru
        _
      %p185 = scmp.le.s32.totalorder 1, %s13
      %p186 = scmp.lt.s32.totalorder %s13, 3
      %p187 = pnand %p185, %p186
      %p188 = pneg %p187
      // Predicated region
      $region33: #{tpu_custom_call.1} parent=5 // pred_check
        _
      $region34: #{tpu_custom_call.1} parent=5 // pred_check_branch
        %190 = sbr.rel (%p187) target = $region36
      $region35: #{tpu_custom_call.1} parent=5 // pred_region
        %s191 = ssub.s32 %s13, 1
        %s192 = smul.u32 2, %s23
        %p193 = scmp.lt.s32.totalorder %s22, 1
        %s194 = scalar_select %p193, %s22, 1
        %p195 = scmp.lt.s32.totalorder %s192, 1
        %s196 = scalar_select %p195, %s192, 1
        %s197 = smul.addr %s194, 2
        %s198 = sadd.s32 %s196, %s197
        %s199 = smul.addr %s198, 8
        %s200 = scalar_lea.vmem %s0, %s199
        %p201 = pneg %p53
        %p202 = pneg %p50
        %p203 = pneg %p74
        %p204 = pneg %p71
        %p205 = pneg %p95
        %p206 = pneg %p92
        %p207 = pneg %p116
        %p208 = pneg %p113
        %p209 = pneg %p144
        %p210 = pneg %p141
        %s211 = sand.u32 %s131, 1
        %s212 = scalar_lea.sflag [#allocation3], %s211
        %s213 = sand.u32 %s131, 1
        %s214 = smul.addr %s213, 32
        %s215 = scalar_lea.vmem [#allocation2], %s214
        %s216 = smul.u32 2, %s23
        %p217 = scmp.lt.s32.totalorder %s22, 1
        %s218 = scalar_select %p217, %s22, 1
        %p219 = scmp.lt.s32.totalorder %s216, 1
        %s220 = scalar_select %p219, %s216, 1
        %s221 = smul.addr %s218, 2
        %s222 = sadd.s32 %s220, %s221
        %s223 = smul.addr %s222, 8
        %s224 = scalar_lea.vmem %s0, %s223
        %s225 = smul.u32 2, %s23
        %s226 = smul.u32 2, %s23
        %v228 = vld [vmem:[%s224] sm:$0xff]
        %v229 = vld [vmem:[%s224 + $0x8] sm:$0xff]
        %v230 = vpack.c.bf16 %v228, %v228
        %v231 = vpack.c.bf16 %v229, %v229
        %v232 = vunpack.c.l.bf16 %v230
        %v233 = vunpack.c.l.bf16 %v231
        %v234 = vsub.f32 %v228, %v232
        %v235 = vsub.f32 %v229, %v233
        %v236 = vpack.c.bf16 %v234, %v234
        %v237 = vpack.c.bf16 %v235, %v235
        %v238 = vld [vmem:[%s1] sm:$0xf]
        %v239 = vld [vmem:[%s1 + $0x4] sm:$0xf]
        %v242 = vunpack.c.l.b16 %v238
        %v243 = vunpack.c.l.b16 %v239
        %v244 = vpack.c.b16 %v243, %v242
        %vm245 = vcmask 64512
        %v247 = vsel %vm245, %v244, 0
        %vm249 = vcmask 1043456
        %v251 = vsel %vm249, %v236, 0
        %v254 = vsel %vm249, %v237, 0
        %256 = vmatprep.subr.bf16.mxu0 %v254
        %257 = vmatpush1.bf16.msra.mxu0 %v251
        %258 = vmatprep.subr.bf16.mxu0 0
        %259 = vmatpush1.bf16.msra.mxu0 0
        %260 = vmatprep.subr.bf16.mxu0 0
        %261 = vmatpush1.bf16.msra.mxu0 0
        %262 = vmatprep.subr.bf16.mxu0 0
        %263 = vmatpush1.bf16.msra.mxu0 0
        %264 = vmatprep.subr.bf16.mxu0 0
        %265 = vmatpush1.bf16.msra.mxu0 0
        %266 = vmatprep.subr.bf16.mxu0 0
        %267 = vmatpush1.bf16.msra.mxu0 0
        %268 = vmatprep.subr.bf16.mxu0 0
        %269 = vmatpush1.bf16.msra.mxu0 0
        %270 = vmatprep.subr.bf16.mxu0 0
        %271 = vmatpush1.bf16.msra.mxu0 0
        %272 = vmatprep.subr.bf16.mxu0 0
        %273 = vmatpush1.bf16.msra.mxu0 0
        %274 = vmatprep.subr.bf16.mxu0 0
        %275 = vmatpush1.bf16.msra.mxu0 0
        %276 = vmatprep.subr.bf16.mxu0 0
        %277 = vmatpush1.bf16.msra.mxu0 0
        %278 = vmatprep.subr.bf16.mxu0 0
        %279 = vmatpush1.bf16.msra.mxu0 0
        %280 = vmatprep.subr.bf16.mxu0 0
        %281 = vmatpush1.bf16.msra.mxu0 0
        %282 = vmatprep.subr.bf16.mxu0 0
        %283 = vmatpush1.bf16.msra.mxu0 0
        %284 = vmatprep.subr.bf16.mxu0 0
        %285 = vmatpush1.bf16.msra.mxu0 0
        %286 = vmatprep.subr.bf16.mxu0 0
        %287 = vmatpush1.bf16.msra.mxu0 0
        %288 = vmatprep.mubr.bf16.mxu0 0
        %289 = vmatmul.mubr.bf16.gmra.mrb[0].mxu0 %v247
        %v290 = vpop.f32.mrb[0].mxu0
        %v291 = vadd.f32 0.0, %v290
        %v292 = vpop.f32.mrb[0].mxu0
        %v293 = vadd.f32 0.0, %v292
        %v294 = vpop.f32.mrb[0].mxu0
        %v295 = vadd.f32 0.0, %v294
        %v296 = vpop.f32.mrb[0].mxu0
        %v297 = vadd.f32 0.0, %v296
        %298 = vdwg.mxu0
        %v300 = vsel %vm249, %v230, 0
        %v303 = vsel %vm249, %v231, 0
        %305 = vmatprep.subr.bf16.mxu0 %v303
        %306 = vmatpush1.bf16.msra.mxu0 %v300
        %307 = vmatprep.subr.bf16.mxu0 0
        %308 = vmatpush1.bf16.msra.mxu0 0
        %309 = vmatprep.subr.bf16.mxu0 0
        %310 = vmatpush1.bf16.msra.mxu0 0
        %311 = vmatprep.subr.bf16.mxu0 0
        %312 = vmatpush1.bf16.msra.mxu0 0
        %313 = vmatprep.subr.bf16.mxu0 0
        %314 = vmatpush1.bf16.msra.mxu0 0
        %315 = vmatprep.subr.bf16.mxu0 0
        %316 = vmatpush1.bf16.msra.mxu0 0
        %317 = vmatprep.subr.bf16.mxu0 0
        %318 = vmatpush1.bf16.msra.mxu0 0
        %319 = vmatprep.subr.bf16.mxu0 0
        %320 = vmatpush1.bf16.msra.mxu0 0
        %321 = vmatprep.subr.bf16.mxu0 0
        %322 = vmatpush1.bf16.msra.mxu0 0
        %323 = vmatprep.subr.bf16.mxu0 0
        %324 = vmatpush1.bf16.msra.mxu0 0
        %325 = vmatprep.subr.bf16.mxu0 0
        %326 = vmatpush1.bf16.msra.mxu0 0
        %327 = vmatprep.subr.bf16.mxu0 0
        %328 = vmatpush1.bf16.msra.mxu0 0
        %329 = vmatprep.subr.bf16.mxu0 0
        %330 = vmatpush1.bf16.msra.mxu0 0
        %331 = vmatprep.subr.bf16.mxu0 0
        %332 = vmatpush1.bf16.msra.mxu0 0
        %333 = vmatprep.subr.bf16.mxu0 0
        %334 = vmatpush1.bf16.msra.mxu0 0
        %335 = vmatprep.subr.bf16.mxu0 0
        %336 = vmatpush1.bf16.msra.mxu0 0
        %337 = vmatprep.mubr.bf16.mxu0 0
        %338 = vmatmul.mubr.bf16.gmra.mrb[0].mxu0 %v247
        %v339 = vpop.f32.mrb[0].mxu0
        %v340 = vadd.f32 %v291, %v339
        %v341 = vpop.f32.mrb[0].mxu0
        %v342 = vadd.f32 %v293, %v341
        %v343 = vpop.f32.mrb[0].mxu0
        %v344 = vadd.f32 %v295, %v343
        %v345 = vpop.f32.mrb[0].mxu0
        %v346 = vadd.f32 %v297, %v345
        %347 = vdwg.mxu0
        %v348 = vmul.f32 %v228, %v228
        %v349 = vmul.f32 %v229, %v229
        %v350 = vrot.slane %v348, 4
        %v351 = vadd.f32 %v348, %v350
        %v352 = vrot.slane %v351, 2
        %v353 = vadd.f32 %v351, %v352
        %v354 = vrot.slane %v353, 1
        %v355 = vadd.f32 %v353, %v354
        %v356 = vrot.slane %v349, 4
        %v357 = vadd.f32 %v349, %v356
        %v358 = vrot.slane %v357, 2
        %v359 = vadd.f32 %v357, %v358
        %v360 = vrot.slane %v359, 1
        %v361 = vadd.f32 %v359, %v360
        %v362 = vmul.f32 %v340, %v340
        %v363 = vmul.f32 %v342, %v342
        %v364 = vmul.f32 %v344, %v344
        %v365 = vmul.f32 %v346, %v346
        %v366 = vsub.f32 %v362, %v355
        %v367 = vsub.f32 %v363, %v361
        %v368 = vsub.f32 %v364, %v355
        %v369 = vsub.f32 %v365, %v361
        %v370 = vmul.f32 %v366, 0.5
        %v371 = vmul.f32 %v367, 0.5
        %v372 = vmul.f32 %v368, 0.5
        %v373 = vmul.f32 %v369, 0.5
        %v374 = vsub.f32 %v340, %v370
        %v375 = vsub.f32 %v342, %v371
        %v376 = vsub.f32 %v344, %v372
        %v377 = vsub.f32 %v346, %v373
        %v378 = vmul.f32 %v374, 0.5
        %v379 = vmul.f32 %v375, 0.5
        %v380 = vmul.f32 %v376, 0.5
        %v381 = vmul.f32 %v377, 0.5
        %v382 = vand.u32 2147483647, %v378
        %vm383 = vcmp.le.f32.partialorder %v382, 0.7853982
        %vm384 = vcmp.lt.s32.totalorder %v378, 0
        %v385 = vand.u32 %v378, 2139095040
        %v386 = vshrl.u32 %v385, 23
        %v387 = vsub.s32 %v386, 127
        %v388 = vand.u32 2147483647, %v378
        %v389 = vand.u32 %v388, 8388607
        %v390 = vor.u32 %v389, 8388608
        %v391 = vsub.s32 0, %v390
        %v392 = vadd.s32 %v387, 1
        %vm393 = vcmp.gt.s32.totalorder %v392, 0
        %v394 = vsel %vm393, %v392, 0
        %v395 = vshrl.u32 %v394, 5
        %v396 = vand.u32 %v394, 31
        %v397 = vsub.s32 32, %v396
        %v398 = vshrl.u32 683565275, %v397
        %v399 = vshll.u32 683565275, %v396
        %v400 = vshrl.u32 2475754826, %v397
        %v401 = vor.u32 %v399, %v400
        %v402 = vshll.u32 2475754826, %v396
        %v403 = vshrl.u32 2131351028, %v397
        %v404 = vor.u32 %v402, %v403
        %v405 = vshll.u32 2131351028, %v396
        %v406 = vshrl.u32 2102212464, %v397
        %v407 = vor.u32 %v405, %v406
        %v408 = vshll.u32 2102212464, %v396
        %v409 = vshrl.u32 920167782, %v397
        %v410 = vor.u32 %v408, %v409
        %v411 = vshll.u32 920167782, %v396
        %v412 = vshrl.u32 1326507024, %v397
        %v413 = vor.u32 %v411, %v412
        %vm414 = vcmp.lt.s32.totalorder %v395, 1
        %vm415 = vcmp.lt.s32.totalorder %v395, 2
        %vm416 = vcmp.lt.s32.totalorder %v395, 3
        %vm417 = vcmp.lt.s32.totalorder %v395, 4
        %v418 = vsel %vm414, %v398, %v401
        %v419 = vsel %vm417, %v407, 2102212464
        %v420 = vsel %vm416, %v404, %v419
        %v421 = vsel %vm415, %v418, %v420
        %v422 = vsel %vm414, %v401, %v404
        %v423 = vsel %vm417, %v410, 920167782
        %v424 = vsel %vm416, %v407, %v423
        %v425 = vsel %vm415, %v422, %v424
        %v426 = vsel %vm414, %v404, %v407
        %v427 = vsel %vm417, %v413, 1326507024
        %v428 = vsel %vm416, %v410, %v427
        %v429 = vsel %vm415, %v426, %v428
        %v430 = vshll.u32 %v390, 8
        %v431 = vmul.u32.u64.compose %v430, %v429
        %v432 = vextract.low.u32 %v431
        %v433 = vextract.high.u32 %v431
        %v434 = vmul.u32.u64.compose %v430, %v425
        %v435 = vextract.low.u32 %v434
        %v436 = vextract.high.u32 %v434
        %v437 = vmul.u32 %v430, %v421
        %v438 = vadd.s32 %v433, %v435
        %vm439 = vc.u32 %v433, %v435
        %v440 = vadd.s32 %v436, 1
        %v441 = vsel %vm439, %v440, %v436
        %v442 = vadd.s32 %v437, %v441
        %v443 = vadd.s32 %v442, 536870912
        %v444 = vshrl.u32 %v443, 30
        %v445 = vshll.u32 %v444, 30
        %v446 = vsub.s32 %v442, %v445
        %vm447 = vcmp.lt.s32.totalorder %v446, 0
        %v448 = vsub.s32 0, %v446
        %v449 = vsel %vm447, %v448, %v446
        %v450 = vclz %v449
        %v451 = vsub.s32 %v450, 2
        %vm452 = vcmp.gt.s32.totalorder 0, %v451
        %v453 = vsel %vm452, 0, %v451
        %v454 = vsub.s32 32, %v453
        %v455 = vshll.u32 %v446, %v453
        %v456 = vshrl.u32 %v438, %v454
        %v457 = vor.u32 %v455, %v456
        %v458 = vsub.s32 4294967266, %v453
        %v459 = vadd.s32 %v458, 127
        %v460 = vshll.u32 %v459, 23
        %v461 = vor.u32 4788187, %v460
        %v462 = vand.u32 2147483647, %v461
        %v464 = vcvt.s32.f32 %v457
        %v465 = vmul.f32 %v464, %v462
        %v466 = vxor.u32 %v465, 2147483648
        %v467 = vsel %vm384, %v466, %v465
        %v468 = vsub.s32 4, %v444
        %v469 = vsel %vm384, %v468, %v444
        %v470 = vsel %vm383, %v378, %v467
        %v471 = vsel %vm383, 0, %v469
        %v472 = vcosq.f32.pop %v470
        %v473 = vsinq.f32.pop %v470
        %vm474 = vweird.f32 %v378
        %v475 = vand.u32 %v471, 3
        %vm476 = vcmp.lt.s32.totalorder %v475, 2
        %vm477 = vcmp.eq.s32.totalorder %v475, 0
        %v478 = vxor.u32 %v473, 2147483648
        %v479 = vsel %vm477, %v472, %v478
        %vm480 = vcmp.eq.s32.totalorder %v475, 2
        %v481 = vxor.u32 %v472, 2147483648
        %v482 = vsel %vm480, %v481, %v473
        %v483 = vsel %vm476, %v479, %v482
        %v484 = vsel %vm474, nan, %v483
        %v485 = vand.u32 2147483647, %v379
        %vm486 = vcmp.le.f32.partialorder %v485, 0.7853982
        %vm487 = vcmp.lt.s32.totalorder %v379, 0
        %v488 = vand.u32 %v379, 2139095040
        %v489 = vshrl.u32 %v488, 23
        %v490 = vsub.s32 %v489, 127
        %v491 = vand.u32 2147483647, %v379
        %v492 = vand.u32 %v491, 8388607
        %v493 = vor.u32 %v492, 8388608
        %v494 = vsub.s32 0, %v493
        %v495 = vadd.s32 %v490, 1
        %vm496 = vcmp.gt.s32.totalorder %v495, 0
        %v497 = vsel %vm496, %v495, 0
        %v498 = vshrl.u32 %v497, 5
        %v499 = vand.u32 %v497, 31
        %v500 = vsub.s32 32, %v499
        %v501 = vshrl.u32 683565275, %v500
        %v502 = vshll.u32 683565275, %v499
        %v503 = vshrl.u32 2475754826, %v500
        %v504 = vor.u32 %v502, %v503
        %v505 = vshll.u32 2475754826, %v499
        %v506 = vshrl.u32 2131351028, %v500
        %v507 = vor.u32 %v505, %v506
        %v508 = vshll.u32 2131351028, %v499
        %v509 = vshrl.u32 2102212464, %v500
        %v510 = vor.u32 %v508, %v509
        %v511 = vshll.u32 2102212464, %v499
        %v512 = vshrl.u32 920167782, %v500
        %v513 = vor.u32 %v511, %v512
        %v514 = vshll.u32 920167782, %v499
        %v515 = vshrl.u32 1326507024, %v500
        %v516 = vor.u32 %v514, %v515
        %vm517 = vcmp.lt.s32.totalorder %v498, 1
        %vm518 = vcmp.lt.s32.totalorder %v498, 2
        %vm519 = vcmp.lt.s32.totalorder %v498, 3
        %vm520 = vcmp.lt.s32.totalorder %v498, 4
        %v521 = vsel %vm517, %v501, %v504
        %v522 = vsel %vm520, %v510, 2102212464
        %v523 = vsel %vm519, %v507, %v522
        %v524 = vsel %vm518, %v521, %v523
        %v525 = vsel %vm517, %v504, %v507
        %v526 = vsel %vm520, %v513, 920167782
        %v527 = vsel %vm519, %v510, %v526
        %v528 = vsel %vm518, %v525, %v527
        %v529 = vsel %vm517, %v507, %v510
        %v530 = vsel %vm520, %v516, 1326507024
        %v531 = vsel %vm519, %v513, %v530
        %v532 = vsel %vm518, %v529, %v531
        %v533 = vshll.u32 %v493, 8
        %v534 = vmul.u32.u64.compose %v533, %v532
        %v535 = vextract.low.u32 %v534
        %v536 = vextract.high.u32 %v534
        %v537 = vmul.u32.u64.compose %v533, %v528
        %v538 = vextract.low.u32 %v537
        %v539 = vextract.high.u32 %v537
        %v540 = vmul.u32 %v533, %v524
        %v541 = vadd.s32 %v536, %v538
        %vm542 = vc.u32 %v536, %v538
        %v543 = vadd.s32 %v539, 1
        %v544 = vsel %vm542, %v543, %v539
        %v545 = vadd.s32 %v540, %v544
        %v546 = vadd.s32 %v545, 536870912
        %v547 = vshrl.u32 %v546, 30
        %v548 = vshll.u32 %v547, 30
        %v549 = vsub.s32 %v545, %v548
        %vm550 = vcmp.lt.s32.totalorder %v549, 0
        %v551 = vsub.s32 0, %v549
        %v552 = vsel %vm550, %v551, %v549
        %v553 = vclz %v552
        %v554 = vsub.s32 %v553, 2
        %vm555 = vcmp.gt.s32.totalorder 0, %v554
        %v556 = vsel %vm555, 0, %v554
        %v557 = vsub.s32 32, %v556
        %v558 = vshll.u32 %v549, %v556
        %v559 = vshrl.u32 %v541, %v557
        %v560 = vor.u32 %v558, %v559
        %v561 = vsub.s32 4294967266, %v556
        %v562 = vadd.s32 %v561, 127
        %v563 = vshll.u32 %v562, 23
        %v564 = vor.u32 4788187, %v563
        %v565 = vand.u32 2147483647, %v564
        %v567 = vcvt.s32.f32 %v560
        %v568 = vmul.f32 %v567, %v565
        %v569 = vxor.u32 %v568, 2147483648
        %v570 = vsel %vm487, %v569, %v568
        %v571 = vsub.s32 4, %v547
        %v572 = vsel %vm487, %v571, %v547
        %v573 = vsel %vm486, %v379, %v570
        %v574 = vsel %vm486, 0, %v572
        %v575 = vcosq.f32.pop %v573
        %v576 = vsinq.f32.pop %v573
        %vm577 = vweird.f32 %v379
        %v578 = vand.u32 %v574, 3
        %vm579 = vcmp.lt.s32.totalorder %v578, 2
        %vm580 = vcmp.eq.s32.totalorder %v578, 0
        %v581 = vxor.u32 %v576, 2147483648
        %v582 = vsel %vm580, %v575, %v581
        %vm583 = vcmp.eq.s32.totalorder %v578, 2
        %v584 = vxor.u32 %v575, 2147483648
        %v585 = vsel %vm583, %v584, %v576
        %v586 = vsel %vm579, %v582, %v585
        %v587 = vsel %vm577, nan, %v586
        %v588 = vand.u32 2147483647, %v380
        %vm589 = vcmp.le.f32.partialorder %v588, 0.7853982
        %vm590 = vcmp.lt.s32.totalorder %v380, 0
        %v591 = vand.u32 %v380, 2139095040
        %v592 = vshrl.u32 %v591, 23
        %v593 = vsub.s32 %v592, 127
        %v594 = vand.u32 2147483647, %v380
        %v595 = vand.u32 %v594, 8388607
        %v596 = vor.u32 %v595, 8388608
        %v597 = vsub.s32 0, %v596
        %v598 = vadd.s32 %v593, 1
        %vm599 = vcmp.gt.s32.totalorder %v598, 0
        %v600 = vsel %vm599, %v598, 0
        %v601 = vshrl.u32 %v600, 5
        %v602 = vand.u32 %v600, 31
        %v603 = vsub.s32 32, %v602
        %v604 = vshrl.u32 683565275, %v603
        %v605 = vshll.u32 683565275, %v602
        %v606 = vshrl.u32 2475754826, %v603
        %v607 = vor.u32 %v605, %v606
        %v608 = vshll.u32 2475754826, %v602
        %v609 = vshrl.u32 2131351028, %v603
        %v610 = vor.u32 %v608, %v609
        %v611 = vshll.u32 2131351028, %v602
        %v612 = vshrl.u32 2102212464, %v603
        %v613 = vor.u32 %v611, %v612
        %v614 = vshll.u32 2102212464, %v602
        %v615 = vshrl.u32 920167782, %v603
        %v616 = vor.u32 %v614, %v615
        %v617 = vshll.u32 920167782, %v602
        %v618 = vshrl.u32 1326507024, %v603
        %v619 = vor.u32 %v617, %v618
        %vm620 = vcmp.lt.s32.totalorder %v601, 1
        %vm621 = vcmp.lt.s32.totalorder %v601, 2
        %vm622 = vcmp.lt.s32.totalorder %v601, 3
        %vm623 = vcmp.lt.s32.totalorder %v601, 4
        %v624 = vsel %vm620, %v604, %v607
        %v625 = vsel %vm623, %v613, 2102212464
        %v626 = vsel %vm622, %v610, %v625
        %v627 = vsel %vm621, %v624, %v626
        %v628 = vsel %vm620, %v607, %v610
        %v629 = vsel %vm623, %v616, 920167782
        %v630 = vsel %vm622, %v613, %v629
        %v631 = vsel %vm621, %v628, %v630
        %v632 = vsel %vm620, %v610, %v613
        %v633 = vsel %vm623, %v619, 1326507024
        %v634 = vsel %vm622, %v616, %v633
        %v635 = vsel %vm621, %v632, %v634
        %v636 = vshll.u32 %v596, 8
        %v637 = vmul.u32.u64.compose %v636, %v635
        %v638 = vextract.low.u32 %v637
        %v639 = vextract.high.u32 %v637
        %v640 = vmul.u32.u64.compose %v636, %v631
        %v641 = vextract.low.u32 %v640
        %v642 = vextract.high.u32 %v640
        %v643 = vmul.u32 %v636, %v627
        %v644 = vadd.s32 %v639, %v641
        %vm645 = vc.u32 %v639, %v641
        %v646 = vadd.s32 %v642, 1
        %v647 = vsel %vm645, %v646, %v642
        %v648 = vadd.s32 %v643, %v647
        %v649 = vadd.s32 %v648, 536870912
        %v650 = vshrl.u32 %v649, 30
        %v651 = vshll.u32 %v650, 30
        %v652 = vsub.s32 %v648, %v651
        %vm653 = vcmp.lt.s32.totalorder %v652, 0
        %v654 = vsub.s32 0, %v652
        %v655 = vsel %vm653, %v654, %v652
        %v656 = vclz %v655
        %v657 = vsub.s32 %v656, 2
        %vm658 = vcmp.gt.s32.totalorder 0, %v657
        %v659 = vsel %vm658, 0, %v657
        %v660 = vsub.s32 32, %v659
        %v661 = vshll.u32 %v652, %v659
        %v662 = vshrl.u32 %v644, %v660
        %v663 = vor.u32 %v661, %v662
        %v664 = vsub.s32 4294967266, %v659
        %v665 = vadd.s32 %v664, 127
        %v666 = vshll.u32 %v665, 23
        %v667 = vor.u32 4788187, %v666
        %v668 = vand.u32 2147483647, %v667
        %v670 = vcvt.s32.f32 %v663
        %v671 = vmul.f32 %v670, %v668
        %v672 = vxor.u32 %v671, 2147483648
        %v673 = vsel %vm590, %v672, %v671
        %v674 = vsub.s32 4, %v650
        %v675 = vsel %vm590, %v674, %v650
        %v676 = vsel %vm589, %v380, %v673
        %v677 = vsel %vm589, 0, %v675
        %v678 = vcosq.f32.pop %v676
        %v679 = vsinq.f32.pop %v676
        %vm680 = vweird.f32 %v380
        %v681 = vand.u32 %v677, 3
        %vm682 = vcmp.lt.s32.totalorder %v681, 2
        %vm683 = vcmp.eq.s32.totalorder %v681, 0
        %v684 = vxor.u32 %v679, 2147483648
        %v685 = vsel %vm683, %v678, %v684
        %vm686 = vcmp.eq.s32.totalorder %v681, 2
        %v687 = vxor.u32 %v678, 2147483648
        %v688 = vsel %vm686, %v687, %v679
        %v689 = vsel %vm682, %v685, %v688
        %v690 = vsel %vm680, nan, %v689
        %v691 = vand.u32 2147483647, %v381
        %vm692 = vcmp.le.f32.partialorder %v691, 0.7853982
        %vm693 = vcmp.lt.s32.totalorder %v381, 0
        %v694 = vand.u32 %v381, 2139095040
        %v695 = vshrl.u32 %v694, 23
        %v696 = vsub.s32 %v695, 127
        %v697 = vand.u32 2147483647, %v381
        %v698 = vand.u32 %v697, 8388607
        %v699 = vor.u32 %v698, 8388608
        %v700 = vsub.s32 0, %v699
        %v701 = vadd.s32 %v696, 1
        %vm702 = vcmp.gt.s32.totalorder %v701, 0
        %v703 = vsel %vm702, %v701, 0
        %v704 = vshrl.u32 %v703, 5
        %v705 = vand.u32 %v703, 31
        %v706 = vsub.s32 32, %v705
        %v707 = vshrl.u32 683565275, %v706
        %v708 = vshll.u32 683565275, %v705
        %v709 = vshrl.u32 2475754826, %v706
        %v710 = vor.u32 %v708, %v709
        %v711 = vshll.u32 2475754826, %v705
        %v712 = vshrl.u32 2131351028, %v706
        %v713 = vor.u32 %v711, %v712
        %v714 = vshll.u32 2131351028, %v705
        %v715 = vshrl.u32 2102212464, %v706
        %v716 = vor.u32 %v714, %v715
        %v717 = vshll.u32 2102212464, %v705
        %v718 = vshrl.u32 920167782, %v706
        %v719 = vor.u32 %v717, %v718
        %v720 = vshll.u32 920167782, %v705
        %v721 = vshrl.u32 1326507024, %v706
        %v722 = vor.u32 %v720, %v721
        %vm723 = vcmp.lt.s32.totalorder %v704, 1
        %vm724 = vcmp.lt.s32.totalorder %v704, 2
        %vm725 = vcmp.lt.s32.totalorder %v704, 3
        %vm726 = vcmp.lt.s32.totalorder %v704, 4
        %v727 = vsel %vm723, %v707, %v710
        %v728 = vsel %vm726, %v716, 2102212464
        %v729 = vsel %vm725, %v713, %v728
        %v730 = vsel %vm724, %v727, %v729
        %v731 = vsel %vm723, %v710, %v713
        %v732 = vsel %vm726, %v719, 920167782
        %v733 = vsel %vm725, %v716, %v732
        %v734 = vsel %vm724, %v731, %v733
        %v735 = vsel %vm723, %v713, %v716
        %v736 = vsel %vm726, %v722, 1326507024
        %v737 = vsel %vm725, %v719, %v736
        %v738 = vsel %vm724, %v735, %v737
        %v739 = vshll.u32 %v699, 8
        %v740 = vmul.u32.u64.compose %v739, %v738
        %v741 = vextract.low.u32 %v740
        %v742 = vextract.high.u32 %v740
        %v743 = vmul.u32.u64.compose %v739, %v734
        %v744 = vextract.low.u32 %v743
        %v745 = vextract.high.u32 %v743
        %v746 = vmul.u32 %v739, %v730
        %v747 = vadd.s32 %v742, %v744
        %vm748 = vc.u32 %v742, %v744
        %v749 = vadd.s32 %v745, 1
        %v750 = vsel %vm748, %v749, %v745
        %v751 = vadd.s32 %v746, %v750
        %v752 = vadd.s32 %v751, 536870912
        %v753 = vshrl.u32 %v752, 30
        %v754 = vshll.u32 %v753, 30
        %v755 = vsub.s32 %v751, %v754
        %vm756 = vcmp.lt.s32.totalorder %v755, 0
        %v757 = vsub.s32 0, %v755
        %v758 = vsel %vm756, %v757, %v755
        %v759 = vclz %v758
        %v760 = vsub.s32 %v759, 2
        %vm761 = vcmp.gt.s32.totalorder 0, %v760
        %v762 = vsel %vm761, 0, %v760
        %v763 = vsub.s32 32, %v762
        %v764 = vshll.u32 %v755, %v762
        %v765 = vshrl.u32 %v747, %v763
        %v766 = vor.u32 %v764, %v765
        %v767 = vsub.s32 4294967266, %v762
        %v768 = vadd.s32 %v767, 127
        %v769 = vshll.u32 %v768, 23
        %v770 = vor.u32 4788187, %v769
        %v771 = vand.u32 2147483647, %v770
        %v773 = vcvt.s32.f32 %v766
        %v774 = vmul.f32 %v773, %v771
        %v775 = vxor.u32 %v774, 2147483648
        %v776 = vsel %vm693, %v775, %v774
        %v777 = vsub.s32 4, %v753
        %v778 = vsel %vm693, %v777, %v753
        %v779 = vsel %vm692, %v381, %v776
        %v780 = vsel %vm692, 0, %v778
        %v781 = vcosq.f32.pop %v779
        %v782 = vsinq.f32.pop %v779
        %vm783 = vweird.f32 %v381
        %v784 = vand.u32 %v780, 3
        %vm785 = vcmp.lt.s32.totalorder %v784, 2
        %vm786 = vcmp.eq.s32.totalorder %v784, 0
        %v787 = vxor.u32 %v782, 2147483648
        %v788 = vsel %vm786, %v781, %v787
        %vm789 = vcmp.eq.s32.totalorder %v784, 2
        %v790 = vxor.u32 %v781, 2147483648
        %v791 = vsel %vm789, %v790, %v782
        %v792 = vsel %vm785, %v788, %v791
        %v793 = vsel %vm783, nan, %v792
        %v794 = vpack.c.bf16 %v690, %v484
        %v795 = vpack.c.bf16 %v793, %v587
        %v796 = vand.u32 2147483647, %v378
        %vm797 = vcmp.le.f32.partialorder %v796, 0.7853982
        %vm798 = vcmp.lt.s32.totalorder %v378, 0
        %v799 = vand.u32 %v378, 2139095040
        %v800 = vshrl.u32 %v799, 23
        %v801 = vsub.s32 %v800, 127
        %v802 = vand.u32 2147483647, %v378
        %v803 = vand.u32 %v802, 8388607
        %v804 = vor.u32 %v803, 8388608
        %v805 = vsub.s32 0, %v804
        %v806 = vadd.s32 %v801, 1
        %vm807 = vcmp.gt.s32.totalorder %v806, 0
        %v808 = vsel %vm807, %v806, 0
        %v809 = vshrl.u32 %v808, 5
        %v810 = vand.u32 %v808, 31
        %v811 = vsub.s32 32, %v810
        %v812 = vshrl.u32 683565275, %v811
        %v813 = vshll.u32 683565275, %v810
        %v814 = vshrl.u32 2475754826, %v811
        %v815 = vor.u32 %v813, %v814
        %v816 = vshll.u32 2475754826, %v810
        %v817 = vshrl.u32 2131351028, %v811
        %v818 = vor.u32 %v816, %v817
        %v819 = vshll.u32 2131351028, %v810
        %v820 = vshrl.u32 2102212464, %v811
        %v821 = vor.u32 %v819, %v820
        %v822 = vshll.u32 2102212464, %v810
        %v823 = vshrl.u32 920167782, %v811
        %v824 = vor.u32 %v822, %v823
        %v825 = vshll.u32 920167782, %v810
        %v826 = vshrl.u32 1326507024, %v811
        %v827 = vor.u32 %v825, %v826
        %vm828 = vcmp.lt.s32.totalorder %v809, 1
        %vm829 = vcmp.lt.s32.totalorder %v809, 2
        %vm830 = vcmp.lt.s32.totalorder %v809, 3
        %vm831 = vcmp.lt.s32.totalorder %v809, 4
        %v832 = vsel %vm828, %v812, %v815
        %v833 = vsel %vm831, %v821, 2102212464
        %v834 = vsel %vm830, %v818, %v833
        %v835 = vsel %vm829, %v832, %v834
        %v836 = vsel %vm828, %v815, %v818
        %v837 = vsel %vm831, %v824, 920167782
        %v838 = vsel %vm830, %v821, %v837
        %v839 = vsel %vm829, %v836, %v838
        %v840 = vsel %vm828, %v818, %v821
        %v841 = vsel %vm831, %v827, 1326507024
        %v842 = vsel %vm830, %v824, %v841
        %v843 = vsel %vm829, %v840, %v842
        %v844 = vshll.u32 %v804, 8
        %v845 = vmul.u32.u64.compose %v844, %v843
        %v846 = vextract.low.u32 %v845
        %v847 = vextract.high.u32 %v845
        %v848 = vmul.u32.u64.compose %v844, %v839
        %v849 = vextract.low.u32 %v848
        %v850 = vextract.high.u32 %v848
        %v851 = vmul.u32 %v844, %v835
        %v852 = vadd.s32 %v847, %v849
        %vm853 = vc.u32 %v847, %v849
        %v854 = vadd.s32 %v850, 1
        %v855 = vsel %vm853, %v854, %v850
        %v856 = vadd.s32 %v851, %v855
        %v857 = vadd.s32 %v856, 536870912
        %v858 = vshrl.u32 %v857, 30
        %v859 = vshll.u32 %v858, 30
        %v860 = vsub.s32 %v856, %v859
        %vm861 = vcmp.lt.s32.totalorder %v860, 0
        %v862 = vsub.s32 0, %v860
        %v863 = vsel %vm861, %v862, %v860
        %v864 = vclz %v863
        %v865 = vsub.s32 %v864, 2
        %vm866 = vcmp.gt.s32.totalorder 0, %v865
        %v867 = vsel %vm866, 0, %v865
        %v868 = vsub.s32 32, %v867
        %v869 = vshll.u32 %v860, %v867
        %v870 = vshrl.u32 %v852, %v868
        %v871 = vor.u32 %v869, %v870
        %v872 = vsub.s32 4294967266, %v867
        %v873 = vadd.s32 %v872, 127
        %v874 = vshll.u32 %v873, 23
        %v875 = vor.u32 4788187, %v874
        %v876 = vand.u32 2147483647, %v875
        %v878 = vcvt.s32.f32 %v871
        %v879 = vmul.f32 %v878, %v876
        %v880 = vxor.u32 %v879, 2147483648
        %v881 = vsel %vm798, %v880, %v879
        %v882 = vsub.s32 4, %v858
        %v883 = vsel %vm798, %v882, %v858
        %v884 = vsel %vm797, %v378, %v881
        %v885 = vsel %vm797, 0, %v883
        %v886 = vcosq.f32.pop %v884
        %v887 = vsinq.f32.pop %v884
        %vm888 = vweird.f32 %v378
        %v889 = vadd.s32 %v885, 3
        %v890 = vand.u32 %v889, 3
        %vm891 = vcmp.lt.s32.totalorder %v890, 2
        %vm892 = vcmp.eq.s32.totalorder %v890, 0
        %v893 = vxor.u32 %v887, 2147483648
        %v894 = vsel %vm892, %v886, %v893
        %vm895 = vcmp.eq.s32.totalorder %v890, 2
        %v896 = vxor.u32 %v886, 2147483648
        %v897 = vsel %vm895, %v896, %v887
        %v898 = vsel %vm891, %v894, %v897
        %v899 = vsel %vm888, nan, %v898
        %v900 = vand.u32 2147483647, %v379
        %vm901 = vcmp.le.f32.partialorder %v900, 0.7853982
        %vm902 = vcmp.lt.s32.totalorder %v379, 0
        %v903 = vand.u32 %v379, 2139095040
        %v904 = vshrl.u32 %v903, 23
        %v905 = vsub.s32 %v904, 127
        %v906 = vand.u32 2147483647, %v379
        %v907 = vand.u32 %v906, 8388607
        %v908 = vor.u32 %v907, 8388608
        %v909 = vsub.s32 0, %v908
        %v910 = vadd.s32 %v905, 1
        %vm911 = vcmp.gt.s32.totalorder %v910, 0
        %v912 = vsel %vm911, %v910, 0
        %v913 = vshrl.u32 %v912, 5
        %v914 = vand.u32 %v912, 31
        %v915 = vsub.s32 32, %v914
        %v916 = vshrl.u32 683565275, %v915
        %v917 = vshll.u32 683565275, %v914
        %v918 = vshrl.u32 2475754826, %v915
        %v919 = vor.u32 %v917, %v918
        %v920 = vshll.u32 2475754826, %v914
        %v921 = vshrl.u32 2131351028, %v915
        %v922 = vor.u32 %v920, %v921
        %v923 = vshll.u32 2131351028, %v914
        %v924 = vshrl.u32 2102212464, %v915
        %v925 = vor.u32 %v923, %v924
        %v926 = vshll.u32 2102212464, %v914
        %v927 = vshrl.u32 920167782, %v915
        %v928 = vor.u32 %v926, %v927
        %v929 = vshll.u32 920167782, %v914
        %v930 = vshrl.u32 1326507024, %v915
        %v931 = vor.u32 %v929, %v930
        %vm932 = vcmp.lt.s32.totalorder %v913, 1
        %vm933 = vcmp.lt.s32.totalorder %v913, 2
        %vm934 = vcmp.lt.s32.totalorder %v913, 3
        %vm935 = vcmp.lt.s32.totalorder %v913, 4
        %v936 = vsel %vm932, %v916, %v919
        %v937 = vsel %vm935, %v925, 2102212464
        %v938 = vsel %vm934, %v922, %v937
        %v939 = vsel %vm933, %v936, %v938
        %v940 = vsel %vm932, %v919, %v922
        %v941 = vsel %vm935, %v928, 920167782
        %v942 = vsel %vm934, %v925, %v941
        %v943 = vsel %vm933, %v940, %v942
        %v944 = vsel %vm932, %v922, %v925
        %v945 = vsel %vm935, %v931, 1326507024
        %v946 = vsel %vm934, %v928, %v945
        %v947 = vsel %vm933, %v944, %v946
        %v948 = vshll.u32 %v908, 8
        %v949 = vmul.u32.u64.compose %v948, %v947
        %v950 = vextract.low.u32 %v949
        %v951 = vextract.high.u32 %v949
        %v952 = vmul.u32.u64.compose %v948, %v943
        %v953 = vextract.low.u32 %v952
        %v954 = vextract.high.u32 %v952
        %v955 = vmul.u32 %v948, %v939
        %v956 = vadd.s32 %v951, %v953
        %vm957 = vc.u32 %v951, %v953
        %v958 = vadd.s32 %v954, 1
        %v959 = vsel %vm957, %v958, %v954
        %v960 = vadd.s32 %v955, %v959
        %v961 = vadd.s32 %v960, 536870912
        %v962 = vshrl.u32 %v961, 30
        %v963 = vshll.u32 %v962, 30
        %v964 = vsub.s32 %v960, %v963
        %vm965 = vcmp.lt.s32.totalorder %v964, 0
        %v966 = vsub.s32 0, %v964
        %v967 = vsel %vm965, %v966, %v964
        %v968 = vclz %v967
        %v969 = vsub.s32 %v968, 2
        %vm970 = vcmp.gt.s32.totalorder 0, %v969
        %v971 = vsel %vm970, 0, %v969
        %v972 = vsub.s32 32, %v971
        %v973 = vshll.u32 %v964, %v971
        %v974 = vshrl.u32 %v956, %v972
        %v975 = vor.u32 %v973, %v974
        %v976 = vsub.s32 4294967266, %v971
        %v977 = vadd.s32 %v976, 127
        %v978 = vshll.u32 %v977, 23
        %v979 = vor.u32 4788187, %v978
        %v980 = vand.u32 2147483647, %v979
        %v982 = vcvt.s32.f32 %v975
        %v983 = vmul.f32 %v982, %v980
        %v984 = vxor.u32 %v983, 2147483648
        %v985 = vsel %vm902, %v984, %v983
        %v986 = vsub.s32 4, %v962
        %v987 = vsel %vm902, %v986, %v962
        %v988 = vsel %vm901, %v379, %v985
        %v989 = vsel %vm901, 0, %v987
        %v990 = vcosq.f32.pop %v988
        %v991 = vsinq.f32.pop %v988
        %vm992 = vweird.f32 %v379
        %v993 = vadd.s32 %v989, 3
        %v994 = vand.u32 %v993, 3
        %vm995 = vcmp.lt.s32.totalorder %v994, 2
        %vm996 = vcmp.eq.s32.totalorder %v994, 0
        %v997 = vxor.u32 %v991, 2147483648
        %v998 = vsel %vm996, %v990, %v997
        %vm999 = vcmp.eq.s32.totalorder %v994, 2
        %v1000 = vxor.u32 %v990, 2147483648
        %v1001 = vsel %vm999, %v1000, %v991
        %v1002 = vsel %vm995, %v998, %v1001
        %v1003 = vsel %vm992, nan, %v1002
        %v1004 = vand.u32 2147483647, %v380
        %vm1005 = vcmp.le.f32.partialorder %v1004, 0.7853982
        %vm1006 = vcmp.lt.s32.totalorder %v380, 0
        %v1007 = vand.u32 %v380, 2139095040
        %v1008 = vshrl.u32 %v1007, 23
        %v1009 = vsub.s32 %v1008, 127
        %v1010 = vand.u32 2147483647, %v380
        %v1011 = vand.u32 %v1010, 8388607
        %v1012 = vor.u32 %v1011, 8388608
        %v1013 = vsub.s32 0, %v1012
        %v1014 = vadd.s32 %v1009, 1
        %vm1015 = vcmp.gt.s32.totalorder %v1014, 0
        %v1016 = vsel %vm1015, %v1014, 0
        %v1017 = vshrl.u32 %v1016, 5
        %v1018 = vand.u32 %v1016, 31
        %v1019 = vsub.s32 32, %v1018
        %v1020 = vshrl.u32 683565275, %v1019
        %v1021 = vshll.u32 683565275, %v1018
        %v1022 = vshrl.u32 2475754826, %v1019
        %v1023 = vor.u32 %v1021, %v1022
        %v1024 = vshll.u32 2475754826, %v1018
        %v1025 = vshrl.u32 2131351028, %v1019
        %v1026 = vor.u32 %v1024, %v1025
        %v1027 = vshll.u32 2131351028, %v1018
        %v1028 = vshrl.u32 2102212464, %v1019
        %v1029 = vor.u32 %v1027, %v1028
        %v1030 = vshll.u32 2102212464, %v1018
        %v1031 = vshrl.u32 920167782, %v1019
        %v1032 = vor.u32 %v1030, %v1031
        %v1033 = vshll.u32 920167782, %v1018
        %v1034 = vshrl.u32 1326507024, %v1019
        %v1035 = vor.u32 %v1033, %v1034
        %vm1036 = vcmp.lt.s32.totalorder %v1017, 1
        %vm1037 = vcmp.lt.s32.totalorder %v1017, 2
        %vm1038 = vcmp.lt.s32.totalorder %v1017, 3
        %vm1039 = vcmp.lt.s32.totalorder %v1017, 4
        %v1040 = vsel %vm1036, %v1020, %v1023
        %v1041 = vsel %vm1039, %v1029, 2102212464
        %v1042 = vsel %vm1038, %v1026, %v1041
        %v1043 = vsel %vm1037, %v1040, %v1042
        %v1044 = vsel %vm1036, %v1023, %v1026
        %v1045 = vsel %vm1039, %v1032, 920167782
        %v1046 = vsel %vm1038, %v1029, %v1045
        %v1047 = vsel %vm1037, %v1044, %v1046
        %v1048 = vsel %vm1036, %v1026, %v1029
        %v1049 = vsel %vm1039, %v1035, 1326507024
        %v1050 = vsel %vm1038, %v1032, %v1049
        %v1051 = vsel %vm1037, %v1048, %v1050
        %v1052 = vshll.u32 %v1012, 8
        %v1053 = vmul.u32.u64.compose %v1052, %v1051
        %v1054 = vextract.low.u32 %v1053
        %v1055 = vextract.high.u32 %v1053
        %v1056 = vmul.u32.u64.compose %v1052, %v1047
        %v1057 = vextract.low.u32 %v1056
        %v1058 = vextract.high.u32 %v1056
        %v1059 = vmul.u32 %v1052, %v1043
        %v1060 = vadd.s32 %v1055, %v1057
        %vm1061 = vc.u32 %v1055, %v1057
        %v1062 = vadd.s32 %v1058, 1
        %v1063 = vsel %vm1061, %v1062, %v1058
        %v1064 = vadd.s32 %v1059, %v1063
        %v1065 = vadd.s32 %v1064, 536870912
        %v1066 = vshrl.u32 %v1065, 30
        %v1067 = vshll.u32 %v1066, 30
        %v1068 = vsub.s32 %v1064, %v1067
        %vm1069 = vcmp.lt.s32.totalorder %v1068, 0
        %v1070 = vsub.s32 0, %v1068
        %v1071 = vsel %vm1069, %v1070, %v1068
        %v1072 = vclz %v1071
        %v1073 = vsub.s32 %v1072, 2
        %vm1074 = vcmp.gt.s32.totalorder 0, %v1073
        %v1075 = vsel %vm1074, 0, %v1073
        %v1076 = vsub.s32 32, %v1075
        %v1077 = vshll.u32 %v1068, %v1075
        %v1078 = vshrl.u32 %v1060, %v1076
        %v1079 = vor.u32 %v1077, %v1078
        %v1080 = vsub.s32 4294967266, %v1075
        %v1081 = vadd.s32 %v1080, 127
        %v1082 = vshll.u32 %v1081, 23
        %v1083 = vor.u32 4788187, %v1082
        %v1084 = vand.u32 2147483647, %v1083
        %v1086 = vcvt.s32.f32 %v1079
        %v1087 = vmul.f32 %v1086, %v1084
        %v1088 = vxor.u32 %v1087, 2147483648
        %v1089 = vsel %vm1006, %v1088, %v1087
        %v1090 = vsub.s32 4, %v1066
        %v1091 = vsel %vm1006, %v1090, %v1066
        %v1092 = vsel %vm1005, %v380, %v1089
        %v1093 = vsel %vm1005, 0, %v1091
        %v1094 = vcosq.f32.pop %v1092
        %v1095 = vsinq.f32.pop %v1092
        %vm1096 = vweird.f32 %v380
        %v1097 = vadd.s32 %v1093, 3
        %v1098 = vand.u32 %v1097, 3
        %vm1099 = vcmp.lt.s32.totalorder %v1098, 2
        %vm1100 = vcmp.eq.s32.totalorder %v1098, 0
        %v1101 = vxor.u32 %v1095, 2147483648
        %v1102 = vsel %vm1100, %v1094, %v1101
        %vm1103 = vcmp.eq.s32.totalorder %v1098, 2
        %v1104 = vxor.u32 %v1094, 2147483648
        %v1105 = vsel %vm1103, %v1104, %v1095
        %v1106 = vsel %vm1099, %v1102, %v1105
        %v1107 = vsel %vm1096, nan, %v1106
        %v1108 = vand.u32 2147483647, %v381
        %vm1109 = vcmp.le.f32.partialorder %v1108, 0.7853982
        %vm1110 = vcmp.lt.s32.totalorder %v381, 0
        %v1111 = vand.u32 %v381, 2139095040
        %v1112 = vshrl.u32 %v1111, 23
        %v1113 = vsub.s32 %v1112, 127
        %v1114 = vand.u32 2147483647, %v381
        %v1115 = vand.u32 %v1114, 8388607
        %v1116 = vor.u32 %v1115, 8388608
        %v1117 = vsub.s32 0, %v1116
        %v1118 = vadd.s32 %v1113, 1
        %vm1119 = vcmp.gt.s32.totalorder %v1118, 0
        %v1120 = vsel %vm1119, %v1118, 0
        %v1121 = vshrl.u32 %v1120, 5
        %v1122 = vand.u32 %v1120, 31
        %v1123 = vsub.s32 32, %v1122
        %v1124 = vshrl.u32 683565275, %v1123
        %v1125 = vshll.u32 683565275, %v1122
        %v1126 = vshrl.u32 2475754826, %v1123
        %v1127 = vor.u32 %v1125, %v1126
        %v1128 = vshll.u32 2475754826, %v1122
        %v1129 = vshrl.u32 2131351028, %v1123
        %v1130 = vor.u32 %v1128, %v1129
        %v1131 = vshll.u32 2131351028, %v1122
        %v1132 = vshrl.u32 2102212464, %v1123
        %v1133 = vor.u32 %v1131, %v1132
        %v1134 = vshll.u32 2102212464, %v1122
        %v1135 = vshrl.u32 920167782, %v1123
        %v1136 = vor.u32 %v1134, %v1135
        %v1137 = vshll.u32 920167782, %v1122
        %v1138 = vshrl.u32 1326507024, %v1123
        %v1139 = vor.u32 %v1137, %v1138
        %vm1140 = vcmp.lt.s32.totalorder %v1121, 1
        %vm1141 = vcmp.lt.s32.totalorder %v1121, 2
        %vm1142 = vcmp.lt.s32.totalorder %v1121, 3
        %vm1143 = vcmp.lt.s32.totalorder %v1121, 4
        %v1144 = vsel %vm1140, %v1124, %v1127
        %v1145 = vsel %vm1143, %v1133, 2102212464
        %v1146 = vsel %vm1142, %v1130, %v1145
        %v1147 = vsel %vm1141, %v1144, %v1146
        %v1148 = vsel %vm1140, %v1127, %v1130
        %v1149 = vsel %vm1143, %v1136, 920167782
        %v1150 = vsel %vm1142, %v1133, %v1149
        %v1151 = vsel %vm1141, %v1148, %v1150
        %v1152 = vsel %vm1140, %v1130, %v1133
        %v1153 = vsel %vm1143, %v1139, 1326507024
        %v1154 = vsel %vm1142, %v1136, %v1153
        %v1155 = vsel %vm1141, %v1152, %v1154
        %v1156 = vshll.u32 %v1116, 8
        %v1157 = vmul.u32.u64.compose %v1156, %v1155
        %v1158 = vextract.low.u32 %v1157
        %v1159 = vextract.high.u32 %v1157
        %v1160 = vmul.u32.u64.compose %v1156, %v1151
        %v1161 = vextract.low.u32 %v1160
        %v1162 = vextract.high.u32 %v1160
        %v1163 = vmul.u32 %v1156, %v1147
        %v1164 = vadd.s32 %v1159, %v1161
        %vm1165 = vc.u32 %v1159, %v1161
        %v1166 = vadd.s32 %v1162, 1
        %v1167 = vsel %vm1165, %v1166, %v1162
        %v1168 = vadd.s32 %v1163, %v1167
        %v1169 = vadd.s32 %v1168, 536870912
        %v1170 = vshrl.u32 %v1169, 30
        %v1171 = vshll.u32 %v1170, 30
        %v1172 = vsub.s32 %v1168, %v1171
        %vm1173 = vcmp.lt.s32.totalorder %v1172, 0
        %v1174 = vsub.s32 0, %v1172
        %v1175 = vsel %vm1173, %v1174, %v1172
        %v1176 = vclz %v1175
        %v1177 = vsub.s32 %v1176, 2
        %vm1178 = vcmp.gt.s32.totalorder 0, %v1177
        %v1179 = vsel %vm1178, 0, %v1177
        %v1180 = vsub.s32 32, %v1179
        %v1181 = vshll.u32 %v1172, %v1179
        %v1182 = vshrl.u32 %v1164, %v1180
        %v1183 = vor.u32 %v1181, %v1182
        %v1184 = vsub.s32 4294967266, %v1179
        %v1185 = vadd.s32 %v1184, 127
        %v1186 = vshll.u32 %v1185, 23
        %v1187 = vor.u32 4788187, %v1186
        %v1188 = vand.u32 2147483647, %v1187
        %v1190 = vcvt.s32.f32 %v1183
        %v1191 = vmul.f32 %v1190, %v1188
        %v1192 = vxor.u32 %v1191, 2147483648
        %v1193 = vsel %vm1110, %v1192, %v1191
        %v1194 = vsub.s32 4, %v1170
        %v1195 = vsel %vm1110, %v1194, %v1170
        %v1196 = vsel %vm1109, %v381, %v1193
        %v1197 = vsel %vm1109, 0, %v1195
        %v1198 = vcosq.f32.pop %v1196
        %v1199 = vsinq.f32.pop %v1196
        %vm1200 = vweird.f32 %v381
        %v1201 = vadd.s32 %v1197, 3
        %v1202 = vand.u32 %v1201, 3
        %vm1203 = vcmp.lt.s32.totalorder %v1202, 2
        %vm1204 = vcmp.eq.s32.totalorder %v1202, 0
        %v1205 = vxor.u32 %v1199, 2147483648
        %v1206 = vsel %vm1204, %v1198, %v1205
        %vm1207 = vcmp.eq.s32.totalorder %v1202, 2
        %v1208 = vxor.u32 %v1198, 2147483648
        %v1209 = vsel %vm1207, %v1208, %v1199
        %v1210 = vsel %vm1203, %v1206, %v1209
        %v1211 = vsel %vm1200, nan, %v1210
        %v1212 = vpack.c.bf16 %v1107, %v899
        %v1213 = vpack.c.bf16 %v1211, %v1003
        %v1214 = vld [vmem:[%s2] sm:$0xf]
        %v1215 = vld [vmem:[%s2 + $0x4] sm:$0xf]
        %v1216 = vld [vmem:[%s2 + $0x8] sm:$0xf]
        %v1217 = vld [vmem:[%s2 + $0xc] sm:$0xf]
        %v1218 = vld [vmem:[%s3] sm:$0xf]
        %v1219 = vld [vmem:[%s3 + $0x4] sm:$0xf]
        %v1220 = vld [vmem:[%s3 + $0x8] sm:$0xf]
        %v1221 = vld [vmem:[%s3 + $0xc] sm:$0xf]
        %v1226 = vunpack.c.l.b16 %v1218
        %v1227 = vunpack.c.l.b16 %v1219
        %v1228 = vunpack.c.l.b16 %v1220
        %v1229 = vunpack.c.l.b16 %v1221
        %v1230 = vpack.c.b16 %v1227, %v1226
        %v1231 = vpack.c.b16 %v1229, %v1228
        %vm1232 = vcmask 130048
        %v1234 = vsel %vm1232, %v1230, 0
        %v1237 = vsel %vm1232, %v1231, 0
        %1239 = vmatprep.subr.bf16.mxu0 %v1213
        %1240 = vmatpush1.bf16.msra.mxu0 %v1212
        %1241 = vmatprep.subr.bf16.mxu0 0
        %1242 = vmatpush1.bf16.msra.mxu0 0
        %1243 = vmatprep.subr.bf16.mxu0 0
        %1244 = vmatpush1.bf16.msra.mxu0 0
        %1245 = vmatprep.subr.bf16.mxu0 0
        %1246 = vmatpush1.bf16.msra.mxu0 0
        %1247 = vmatprep.subr.bf16.mxu0 0
        %1248 = vmatpush1.bf16.msra.mxu0 0
        %1249 = vmatprep.subr.bf16.mxu0 0
        %1250 = vmatpush1.bf16.msra.mxu0 0
        %1251 = vmatprep.subr.bf16.mxu0 0
        %1252 = vmatpush1.bf16.msra.mxu0 0
        %1253 = vmatprep.subr.bf16.mxu0 0
        %1254 = vmatpush1.bf16.msra.mxu0 0
        %1255 = vmatprep.subr.bf16.mxu0 0
        %1256 = vmatpush1.bf16.msra.mxu0 0
        %1257 = vmatprep.subr.bf16.mxu0 0
        %1258 = vmatpush1.bf16.msra.mxu0 0
        %1259 = vmatprep.subr.bf16.mxu0 0
        %1260 = vmatpush1.bf16.msra.mxu0 0
        %1261 = vmatprep.subr.bf16.mxu0 0
        %1262 = vmatpush1.bf16.msra.mxu0 0
        %1263 = vmatprep.subr.bf16.mxu0 0
        %1264 = vmatpush1.bf16.msra.mxu0 0
        %1265 = vmatprep.subr.bf16.mxu0 0
        %1266 = vmatpush1.bf16.msra.mxu0 0
        %1267 = vmatprep.subr.bf16.mxu0 0
        %1268 = vmatpush1.bf16.msra.mxu0 0
        %1269 = vmatprep.subr.bf16.mxu0 0
        %1270 = vmatpush1.bf16.msra.mxu0 0
        %1271 = vmatprep.mubr.bf16.mxu0 0
        %1272 = vmatmul.mubr.bf16.gmra.mrb[0].mxu0 %v1234
        %v1273 = vpop.f32.mrb[0].mxu0
        %v1274 = vadd.f32 0.0, %v1273
        %v1275 = vpop.f32.mrb[0].mxu0
        %v1276 = vadd.f32 0.0, %v1275
        %v1277 = vpop.f32.mrb[0].mxu0
        %v1278 = vadd.f32 0.0, %v1277
        %v1279 = vpop.f32.mrb[0].mxu0
        %v1280 = vadd.f32 0.0, %v1279
        %1281 = vmatprep.mubr.bf16.mxu0 0
        %1282 = vmatmul.mubr.bf16.gmra.mrb[0].mxu0 %v1237
        %v1283 = vpop.f32.mrb[0].mxu0
        %v1284 = vadd.f32 0.0, %v1283
        %v1285 = vpop.f32.mrb[0].mxu0
        %v1286 = vadd.f32 0.0, %v1285
        %v1287 = vpop.f32.mrb[0].mxu0
        %v1288 = vadd.f32 0.0, %v1287
        %v1289 = vpop.f32.mrb[0].mxu0
        %v1290 = vadd.f32 0.0, %v1289
        %1291 = vdwg.mxu0
        %v1296 = vunpack.c.l.b16 %v1214
        %v1297 = vunpack.c.l.b16 %v1215
        %v1298 = vunpack.c.l.b16 %v1216
        %v1299 = vunpack.c.l.b16 %v1217
        %v1300 = vpack.c.b16 %v1297, %v1296
        %v1301 = vpack.c.b16 %v1299, %v1298
        %v1303 = vsel %vm1232, %v1300, 0
        %v1306 = vsel %vm1232, %v1301, 0
        %1308 = vmatprep.subr.bf16.mxu0 %v795
        %1309 = vmatpush1.bf16.msra.mxu0 %v794
        %1310 = vmatprep.subr.bf16.mxu0 0
        %1311 = vmatpush1.bf16.msra.mxu0 0
        %1312 = vmatprep.subr.bf16.mxu0 0
        %1313 = vmatpush1.bf16.msra.mxu0 0
        %1314 = vmatprep.subr.bf16.mxu0 0
        %1315 = vmatpush1.bf16.msra.mxu0 0
        %1316 = vmatprep.subr.bf16.mxu0 0
        %1317 = vmatpush1.bf16.msra.mxu0 0
        %1318 = vmatprep.subr.bf16.mxu0 0
        %1319 = vmatpush1.bf16.msra.mxu0 0
        %1320 = vmatprep.subr.bf16.mxu0 0
        %1321 = vmatpush1.bf16.msra.mxu0 0
        %1322 = vmatprep.subr.bf16.mxu0 0
        %1323 = vmatpush1.bf16.msra.mxu0 0
        %1324 = vmatprep.subr.bf16.mxu0 0
        %1325 = vmatpush1.bf16.msra.mxu0 0
        %1326 = vmatprep.subr.bf16.mxu0 0
        %1327 = vmatpush1.bf16.msra.mxu0 0
        %1328 = vmatprep.subr.bf16.mxu0 0
        %1329 = vmatpush1.bf16.msra.mxu0 0
        %1330 = vmatprep.subr.bf16.mxu0 0
        %1331 = vmatpush1.bf16.msra.mxu0 0
        %1332 = vmatprep.subr.bf16.mxu0 0
        %1333 = vmatpush1.bf16.msra.mxu0 0
        %1334 = vmatprep.subr.bf16.mxu0 0
        %1335 = vmatpush1.bf16.msra.mxu0 0
        %1336 = vmatprep.subr.bf16.mxu0 0
        %1337 = vmatpush1.bf16.msra.mxu0 0
        %1338 = vmatprep.subr.bf16.mxu0 0
        %1339 = vmatpush1.bf16.msra.mxu0 0
        %1340 = vmatprep.mubr.bf16.mxu0 0
        %1341 = vmatmul.mubr.bf16.gmra.mrb[0].mxu0 %v1303
        %v1342 = vpop.f32.mrb[0].mxu0
        %v1343 = vadd.f32 %v1274, %v1342
        %v1344 = vpop.f32.mrb[0].mxu0
        %v1345 = vadd.f32 %v1276, %v1344
        %v1346 = vpop.f32.mrb[0].mxu0
        %v1347 = vadd.f32 %v1278, %v1346
        %v1348 = vpop.f32.mrb[0].mxu0
        %v1349 = vadd.f32 %v1280, %v1348
        %1350 = vmatprep.mubr.bf16.mxu0 0
        %1351 = vmatmul.mubr.bf16.gmra.mrb[0].mxu0 %v1306
        %v1352 = vpop.f32.mrb[0].mxu0
        %v1353 = vadd.f32 %v1284, %v1352
        %v1354 = vpop.f32.mrb[0].mxu0
        %v1355 = vadd.f32 %v1286, %v1354
        %v1356 = vpop.f32.mrb[0].mxu0
        %v1357 = vadd.f32 %v1288, %v1356
        %v1358 = vpop.f32.mrb[0].mxu0
        %v1359 = vadd.f32 %v1290, %v1358
        %1360 = vdwg.mxu0
        %v1361 = vmul.f32 %v1343, %v1343
        %v1362 = vmul.f32 %v1345, %v1345
        %v1363 = vmul.f32 %v1347, %v1347
        %v1364 = vmul.f32 %v1349, %v1349
        %v1365 = vmul.f32 %v1353, %v1353
        %v1366 = vmul.f32 %v1355, %v1355
        %v1367 = vmul.f32 %v1357, %v1357
        %v1368 = vmul.f32 %v1359, %v1359
        %v1369 = vadd.f32 %v1361, %v1365
        %v1370 = vadd.f32 %v1362, %v1366
        %v1371 = vadd.f32 %v1363, %v1367
        %v1372 = vadd.f32 %v1364, %v1368
        %1373 = vst [vmem:[%s215] sm:$0xff] %v1369
        %1374 = vst [vmem:[%s215 + $0x8] sm:$0xff] %v1370
        %1375 = vst [vmem:[%s215 + $0x10] sm:$0xff] %v1371
        %1376 = vst [vmem:[%s215 + $0x18] sm:$0xff] %v1372
        %s1377 = sand.u32 %s131, 1
        %s1378 = scalar_lea.sflag [#allocation3], %s1377
        %s1379 = sand.u32 %s131, 1
        %s1380 = smul.addr %s1379, 32
        %s1381 = scalar_lea.vmem [#allocation2], %s1380
        // Predicated region
        $region37: #{tpu_custom_call.1} parent=35 // pred_check
          %p1382 = pneg %p141
        $region38: #{tpu_custom_call.1} parent=35 // pred_check_branch
          %1384 = sbr.rel (%p1382) target = $region40
        $region39: #{tpu_custom_call.1} parent=35 // pred_region
          %s1385 = smul.u32 2, %s23
          %s1387 = ssub.s32 512, 512
          %1388 = vsyncadd %s1378, %s1387
          %s1389 = smul.addr %s22, 4
          %s1390 = sadd.s32 %s1385, %s1389
          %s1391 = smul.addr %s1390, 128
          %s1392 = scalar_lea.hbm %s4, %s1391
          %s1393 = sshll.u32 %s1381, 4
          %s1394 = int_to_ptr.vmem [resolvable:$true] %s1393
          %1399 = dma.vmem_to_hbm [thread:$0]  %s1394, 512, %s1392, %s1378, 256, 256, 16
        $region40: #{tpu_custom_call.1} parent=35 // pred_fallthru
          _
      $region36: #{tpu_custom_call.1} parent=5 // pred_fallthru
        _
      %p1400 = scmp.le.s32.totalorder 2, %s13
      // Predicated region
      $region41: #{tpu_custom_call.1} parent=5 // pred_check
        %p1401 = pneg %p1400
      $region42: #{tpu_custom_call.1} parent=5 // pred_check_branch
        %1403 = sbr.rel (%p1401) target = $region44
      $region43: #{tpu_custom_call.1} parent=5 // pred_region
        %s1404 = ssub.s32 %s13, 2
        // Predicated region
        $region45: #{tpu_custom_call.1} parent=43 // pred_check
          %p1405 = pneg %p147
        $region46: #{tpu_custom_call.1} parent=43 // pred_check_branch
          %1407 = sbr.rel (%p1405) target = $region48
        $region47: #{tpu_custom_call.1} parent=43 // pred_region
          %s1408 = sand.u32 %s132, 1
          %s1409 = scalar_lea.sflag [#allocation3], %s1408
          %s1410 = sand.u32 %s132, 1
          %s1411 = smul.addr %s1410, 32
          %s1412 = scalar_lea.vmem [#allocation2], %s1411
          %1413 = dma.done %s1409, 512
        $region48: #{tpu_custom_call.1} parent=43 // pred_fallthru
          _
      $region44: #{tpu_custom_call.1} parent=5 // pred_fallthru
        _
    $region6: #{tpu_custom_call.1} parent=1 // loop_footer
      %s17 = sadd.s32 1, %s13
    $region7: #{tpu_custom_call.1} parent=1 // loop_footer_branch
      %12 = sbr.rel target = $region3
    $region8: #{tpu_custom_call.1} parent=1 // loop_exit
      _
    %1414 = vsyncpa [#allocation3], 1
    %s1415 = scalar_lea.sflag [#allocation3], 1
    %1416 = vsyncpa %s1415, 1

</llo_original>
